<compile_context>
chip_gen: v7x
topology: tpu7x:2x2x1
jax: 0.10.0
libtpu: 0.0.40
codegen_flags: <defaults>
</compile_context>

<pallas_src>
import functools

import jax
import jax.numpy as jnp
import numpy as np
from jax import lax
from jax.experimental import pallas as pl
from jax.experimental.pallas import tpu as pltpu

MARGIN = 0.2
TEMPERATURE = 0.1   # unused by the reference forward()

_BIG = 1e30         # finite sentinel; never +/-inf (-inf - inf -> NaN)


def _round_up(x, m):
    return ((x + m - 1) // m) * m


def _margin_contrastive_kernel(lab_col_ref, lab_row_ref, f_all_ref, f_tile_ref,
                               out_ref, a_scr, b_scr,
                               *, margin, b_real, tile_i, bp_row):
    """One anchor tile: anchors i in [i0, i0 + tile_i) live on the lane axis."""
    i0 = pl.program_id(0) * tile_i

    # sim[k, i] = <f_k, f_anchor_i>  -> (bp_row, tile_i), f32 accumulation on MXU.
    sim = lax.dot_general(
        f_all_ref[...], f_tile_ref[...],
        (((1,), (1,)), ((), ())),
        preferred_element_type=jnp.float32)

    row = lax.broadcasted_iota(jnp.int32, (bp_row, tile_i), 0)          # candidate j / k
    anchor = i0 + lax.broadcasted_iota(jnp.int32, (bp_row, tile_i), 1)  # global anchor idx

    same = lab_col_ref[...] == lab_row_ref[...]                         # (bp_row, tile_i)
    row_real = row < b_real
    anchor_real = anchor < b_real

    # Diagonal excluded from positives; padded rows / padded anchors excluded.
    neg_m = (~same) & row_real & anchor_real
    pos_m = same & (row != anchor) & row_real

    # Fold masks and margin in once: hinge(i, j, k) = relu(a[k, i] - b[j, i]).
    a_scr[...] = jnp.where(neg_m, sim, -_BIG) + margin   # margin + masked negatives
    b_scr[...] = jnp.where(pos_m, sim, _BIG)             # masked positives

    n_sub = bp_row // 8

    # O(B^3) hinge loop over candidate-positive rows j (REAL rows only).
    # Accumulator is a (8, tile_i) vreg-resident carry; per a-vreg per j:
    # 1 vld + sub + relu + add, no stores -> VALU-bound, not vst-bound.
    def body(j, acc):
        b_row = b_scr[pl.ds(j, 1), :]                     # (1, tile_i) sublane slice
        h = jnp.maximum(a_scr[...] - b_row, 0.0)          # (bp_row, tile_i)
        # Fold the sublane-vreg chunks into the carry (pure VALU adds).
        return acc + jnp.sum(h.reshape(n_sub, 8, tile_i), axis=0)

    acc = lax.fori_loop(0, b_real, body,
                        jnp.zeros((8, tile_i), jnp.float32), unroll=8)

    partial = jnp.sum(acc)                                # one reduction per tile
    out_ref[...] = jnp.broadcast_to(partial, out_ref.shape)   # lane-dense splat store


def margin_contrastive_loss(features, labels, margin=MARGIN):
    """features: [B, D] float, labels: [B] int -> scalar float32 loss."""
    B, D = features.shape
    if B <= 1:
        return jnp.float32(0.0)

    # Row (sublane, candidate j/k) padding: multiple of 8 only.
    bp_row = _round_up(B, 8)

    # Anchor (lane) padding / tiling: lane blocks must be a multiple of 128 or
    # the full dim.  256-wide tiles on non-v5 chips when B is large (2x256 MXU,
    # halves grid steps); keep >=2 grid steps when possible (v7x has 2 TCs).
    try:
        kind = jax.devices()[0].device_kind.lower()
    except Exception:
        kind = ""
    if B <= 128:
        tile_i = bp_row
        bp_anchor = bp_row
    else:
        tile_i = 256 if (B >= 512 and "v5" not in kind) else 128
        bp_anchor = _round_up(B, tile_i)
    num_i = bp_anchor // tile_i

    # f32 features for small D (exactness, matmul is cheap vs the O(B^3) hinge
    # loop); bf16 MXU operands for large D.
    feat_dtype = jnp.bfloat16 if D >= 512 else jnp.float32
    feats = features.astype(feat_dtype)
    lab = labels.astype(jnp.int32)

    f_rows = jnp.pad(feats, ((0, bp_row - B), (0, 0))) if bp_row > B else feats
    f_anch = jnp.pad(feats, ((0, bp_anchor - B), (0, 0))) if bp_anchor > B else feats
    lab_col = (jnp.pad(lab, (0, bp_row - B)) if bp_row > B else lab).reshape(bp_row, 1)
    lab_row = (jnp.pad(lab, (0, bp_anchor - B)) if bp_anchor > B else lab).reshape(1, bp_anchor)

    kernel = functools.partial(
        _margin_contrastive_kernel,
        margin=float(margin), b_real=B, tile_i=tile_i, bp_row=bp_row)

    # VMEM budget from the actual footprint, capped by the chip's capacity.
    isz = jnp.dtype(feat_dtype).itemsize
    footprint = (2 * bp_row * D * isz            # resident feature block (dbl-buffered)
                 + 2 * tile_i * D * isz          # anchor feature tile
                 + 2 * bp_row * 128 * 4          # lab_col (lane-padded)
                 + 2 * 8 * max(tile_i, 128) * 4  # lab_row (sublane-padded)
                 + 2 * 8 * 128 * 4               # output splat
                 + 2 * bp_row * tile_i * 4)      # a_scr + b_scr
    try:
        cap = int(getattr(pltpu.get_tpu_info(), "vmem_capacity_bytes",
                          64 * 1024 * 1024))
    except Exception:
        cap = 64 * 1024 * 1024
    vmem_limit = int(min(max(int(footprint * 1.25) + (4 << 20), 32 << 20),
                         int(cap * 0.85)))
    # TODO(synk): for very large B on v7x (64 MiB VMEM), add an "arbitrary"
    # candidate-row grid axis so the a/b scratch no longer scales with B.

    partials = pl.pallas_call(
        kernel,
        out_shape=jax.ShapeDtypeStruct((num_i, 8, 128), jnp.float32),
        grid_spec=pltpu.PrefetchScalarGridSpec(
            num_scalar_prefetch=0,
            grid=(num_i,),
            in_specs=[
                pl.BlockSpec((bp_row, 1), lambda i: (0, 0)),      # labels column (rows)
                pl.BlockSpec((1, tile_i), lambda i: (0, i)),      # labels row (anchor tile)
                pl.BlockSpec((bp_row, D), lambda i: (0, 0)),      # all features (resident)
                pl.BlockSpec((tile_i, D), lambda i: (i, 0)),      # anchor feature tile
            ],
            out_specs=pl.BlockSpec((1, 8, 128), lambda i: (i, 0, 0)),
            scratch_shapes=[
                pltpu.VMEM((bp_row, tile_i), jnp.float32),        # a: margin + negatives
                pltpu.VMEM((bp_row, tile_i), jnp.float32),        # b: positives
            ],
        ),
        compiler_params=pltpu.CompilerParams(
            dimension_semantics=("parallel",),
            vmem_limit_bytes=vmem_limit),
    )(lab_col, lab_row, f_rows, f_anch)

    loss_sum = jnp.sum(partials[:, 0, 0])

    # Tiny exact O(B^2) integer label statistics in plain JAX: num_valid and
    # the reference's loop-leaked divisor (pos/neg counts of the LAST row).
    eq = lab[:, None] == lab[None, :]
    pos_cnt = jnp.sum(eq, axis=1) - 1                 # per-row positives (diag excl.)
    neg_cnt = (B - 1) - pos_cnt                       # per-row negatives
    valid = (pos_cnt > 0) & (neg_cnt > 0)
    num_valid = jnp.sum(valid.astype(jnp.float32))
    denom = (num_valid
             * pos_cnt[B - 1].astype(jnp.float32)
             * neg_cnt[B - 1].astype(jnp.float32))
    return jnp.where(num_valid > 0, loss_sum / denom, jnp.float32(0.0))


def _reference_numpy(features, labels, margin=MARGIN):
    """Direct transcription of the PyTorch forward (incl. its loop-leak divisor)."""
    f = np.asarray(features, np.float64)
    lab = np.asarray(labels)
    B = f.shape[0]
    if B <= 1:
        return 0.0
    sim = f @ f.T
    pos = (lab[:, None] == lab[None, :]).astype(np.float64)
    neg = 1.0 - pos
    np.fill_diagonal(pos, 0.0)
    loss = 0.0
    num_valid = 0
    lp = ln = 0
    for i in range(B):
        ps = sim[i][pos[i] == 1]
        ns = sim[i][neg[i] == 1]
        lp, ln = len(ps), len(ns)
        if lp == 0 or ln == 0:
            continue
        for p in ps:
            for n in ns:
                loss += max(margin + n - p, 0.0)
        num_valid += 1
    if num_valid > 0:
        loss = loss / (num_valid * lp * ln)
    return float(loss)


if __name__ == "__main__":
    key = jax.random.PRNGKey(0)
    B, D = 8, 32
    features = jax.random.normal(key, (B, D), dtype=jnp.float32)
    features = features / jnp.linalg.norm(features, axis=1, keepdims=True)
    labels = jnp.array([0, 1, 0, 1, 2, 2, 0, 1], dtype=jnp.int32)

    loss = jax.block_until_ready(margin_contrastive_loss(features, labels))

    ref = _reference_numpy(np.asarray(features), np.asarray(labels))
    assert np.allclose(float(loss), ref, rtol=2e-2, atol=2e-3), (float(loss), ref)
    print("KERNEL_OK")
</pallas_src>

<mosaic_0001>
module attributes {stable_mosaic.version = 11 : i64} {
  func.func @_margin_contrastive_kernel(%arg0: i32, %arg1: memref<8x1xi32, #tpu.memory_space<vmem>>, %arg2: memref<1x8xi32, #tpu.memory_space<vmem>>, %arg3: memref<8x32xf32, #tpu.memory_space<vmem>>, %arg4: memref<8x32xf32, #tpu.memory_space<vmem>>, %arg5: memref<1x8x128xf32, #tpu.memory_space<vmem>>, %arg6: memref<8x8xf32, #tpu.memory_space<vmem>>, %arg7: memref<8x8xf32, #tpu.memory_space<vmem>>) attributes {dimension_semantics = [#tpu.dimension_semantics<parallel>], iteration_bounds = array<i64: 1>, scalar_prefetch = 0 : i64, scratch_operands = 2 : i64, tpu.core_type = #tpu.core_type<tc>, window_params = [{pipeline_mode = #tpu.pipeline_mode<synchronous>, transform_indices = @transform_0, window_bounds = array<i64: 8, 1>}, {transform_indices = @transform_1, window_bounds = array<i64: 1, 8>}, {pipeline_mode = #tpu.pipeline_mode<synchronous>, transform_indices = @transform_2, window_bounds = array<i64: 8, 32>}, {transform_indices = @transform_3, window_bounds = array<i64: 8, 32>}, {transform_indices = @transform_4, window_bounds = array<i64: 1, 8, 128>}]} {
    %c8_i32 = arith.constant 8 : i32
    %0 = arith.muli %arg0, %c8_i32 : i32
    %c0 = arith.constant 0 : index
    %c0_0 = arith.constant 0 : index
    %1 = vector.load %arg3[%c0, %c0_0] : memref<8x32xf32, #tpu.memory_space<vmem>>, vector<8x32xf32>
    %c0_1 = arith.constant 0 : index
    %c0_2 = arith.constant 0 : index
    %2 = vector.load %arg4[%c0_1, %c0_2] : memref<8x32xf32, #tpu.memory_space<vmem>>, vector<8x32xf32>
    %cst = arith.constant dense<0.000000e+00> : vector<8x8xf32>
    %3 = tpu.matmul %1, %2, %cst {dimension_numbers = #tpu.dot_dimension_numbers<[1], [1], [0], [0], [0, 0, 1, 0], [], []>} : vector<8x32xf32>, vector<8x32xf32>, vector<8x8xf32> -> vector<8x8xf32>
    %4 = tpu.iota {dimensions = array<i32: 0>} : vector<8x8xi32>
    %5 = tpu.iota {dimensions = array<i32: 1>} : vector<8x8xi32>
    %6 = vector.broadcast %0 : i32 to vector<8x8xi32>
    %7 = arith.addi %6, %5 : vector<8x8xi32>
    %c0_3 = arith.constant 0 : index
    %c0_4 = arith.constant 0 : index
    %8 = vector.load %arg1[%c0_3, %c0_4] : memref<8x1xi32, #tpu.memory_space<vmem>>, vector<8x1xi32>
    %c0_5 = arith.constant 0 : index
    %c0_6 = arith.constant 0 : index
    %9 = vector.load %arg2[%c0_5, %c0_6] : memref<1x8xi32, #tpu.memory_space<vmem>>, vector<1x8xi32>
    %10 = vector.broadcast %8 : vector<8x1xi32> to vector<8x8xi32>
    %11 = vector.broadcast %9 : vector<1x8xi32> to vector<8x8xi32>
    %12 = arith.cmpi eq, %10, %11 : vector<8x8xi32>
    %c8_i32_7 = arith.constant 8 : i32
    %13 = vector.broadcast %c8_i32_7 : i32 to vector<8x8xi32>
    %14 = arith.cmpi slt, %4, %13 : vector<8x8xi32>
    %c8_i32_8 = arith.constant 8 : i32
    %15 = vector.broadcast %c8_i32_8 : i32 to vector<8x8xi32>
    %16 = arith.cmpi slt, %7, %15 : vector<8x8xi32>
    %cst_9 = arith.constant dense<true> : vector<8x8xi1>
    %17 = arith.xori %12, %cst_9 : vector<8x8xi1>
    %18 = arith.andi %17, %14 : vector<8x8xi1>
    %19 = arith.andi %18, %16 : vector<8x8xi1>
    %20 = arith.cmpi ne, %4, %7 : vector<8x8xi32>
    %21 = arith.andi %12, %20 : vector<8x8xi1>
    %22 = arith.andi %21, %14 : vector<8x8xi1>
    %cst_10 = arith.constant -1.000000e+30 : f32
    %23 = vector.broadcast %cst_10 : f32 to vector<8x8xf32>
    %24 = arith.select %19, %3, %23 : vector<8x8xi1>, vector<8x8xf32>
    %cst_11 = arith.constant 2.000000e-01 : f32
    %25 = vector.broadcast %cst_11 : f32 to vector<8x8xf32>
    %26 = arith.addf %24, %25 : vector<8x8xf32>
    %c0_12 = arith.constant 0 : index
    %c0_13 = arith.constant 0 : index
    %27 = vector.load %arg6[%c0_12, %c0_13] : memref<8x8xf32, #tpu.memory_space<vmem>>, vector<8x8xf32>
    tpu.vector_store %arg6[%c0_12, %c0_13], %26 {strides = array<i32>} : memref<8x8xf32, #tpu.memory_space<vmem>>, vector<8x8xf32>,
    %cst_14 = arith.constant 1.000000e+30 : f32
    %28 = vector.broadcast %cst_14 : f32 to vector<8x8xf32>
    %29 = arith.select %22, %3, %28 : vector<8x8xi1>, vector<8x8xf32>
    %c0_15 = arith.constant 0 : index
    %c0_16 = arith.constant 0 : index
    %30 = vector.load %arg7[%c0_15, %c0_16] : memref<8x8xf32, #tpu.memory_space<vmem>>, vector<8x8xf32>
    tpu.vector_store %arg7[%c0_15, %c0_16], %29 {strides = array<i32>} : memref<8x8xf32, #tpu.memory_space<vmem>>, vector<8x8xf32>,
    %cst_17 = arith.constant 0.000000e+00 : f32
    %31 = vector.broadcast %cst_17 : f32 to vector<8x8xf32>
    %c0_i32 = arith.constant 0 : i32
    %32 = arith.index_cast %c0_i32 : i32 to index
    %c0_18 = arith.constant 0 : index
    %33 = vector.load %arg7[%32, %c0_18] : memref<8x8xf32, #tpu.memory_space<vmem>>, vector<1x8xf32>
    %c0_19 = arith.constant 0 : index
    %c0_20 = arith.constant 0 : index
    %34 = vector.load %arg6[%c0_19, %c0_20] : memref<8x8xf32, #tpu.memory_space<vmem>>, vector<8x8xf32>
    %35 = vector.broadcast %33 : vector<1x8xf32> to vector<8x8xf32>
    %36 = arith.subf %34, %35 : vector<8x8xf32>
    %cst_21 = arith.constant 0.000000e+00 : f32
    %37 = vector.broadcast %cst_21 : f32 to vector<8x8xf32>
    %38 = arith.maximumf %36, %37 : vector<8x8xf32>
    %39 = vector.shape_cast %38 : vector<8x8xf32> to vector<1x8x8xf32>
    %cst_22 = arith.constant dense<0.000000e+00> : vector<8x8xf32>
    %40 = vector.multi_reduction <add>, %39, %cst_22 [0] : vector<1x8x8xf32> to vector<8x8xf32>
    %41 = arith.addf %31, %40 : vector<8x8xf32>
    %c1_i32 = arith.constant 1 : i32
    %42 = arith.index_cast %c1_i32 : i32 to index
    %c0_23 = arith.constant 0 : index
    %43 = vector.load %arg7[%42, %c0_23] : memref<8x8xf32, #tpu.memory_space<vmem>>, vector<1x8xf32>
    %c0_24 = arith.constant 0 : index
    %c0_25 = arith.constant 0 : index
    %44 = vector.load %arg6[%c0_24, %c0_25] : memref<8x8xf32, #tpu.memory_space<vmem>>, vector<8x8xf32>
    %45 = vector.broadcast %43 : vector<1x8xf32> to vector<8x8xf32>
    %46 = arith.subf %44, %45 : vector<8x8xf32>
    %cst_26 = arith.constant 0.000000e+00 : f32
    %47 = vector.broadcast %cst_26 : f32 to vector<8x8xf32>
    %48 = arith.maximumf %46, %47 : vector<8x8xf32>
    %49 = vector.shape_cast %48 : vector<8x8xf32> to vector<1x8x8xf32>
    %cst_27 = arith.constant dense<0.000000e+00> : vector<8x8xf32>
    %50 = vector.multi_reduction <add>, %49, %cst_27 [0] : vector<1x8x8xf32> to vector<8x8xf32>
    %51 = arith.addf %41, %50 : vector<8x8xf32>
    %c2_i32 = arith.constant 2 : i32
    %52 = arith.index_cast %c2_i32 : i32 to index
    %c0_28 = arith.constant 0 : index
    %53 = vector.load %arg7[%52, %c0_28] : memref<8x8xf32, #tpu.memory_space<vmem>>, vector<1x8xf32>
    %c0_29 = arith.constant 0 : index
    %c0_30 = arith.constant 0 : index
    %54 = vector.load %arg6[%c0_29, %c0_30] : memref<8x8xf32, #tpu.memory_space<vmem>>, vector<8x8xf32>
    %55 = vector.broadcast %53 : vector<1x8xf32> to vector<8x8xf32>
    %56 = arith.subf %54, %55 : vector<8x8xf32>
    %cst_31 = arith.constant 0.000000e+00 : f32
    %57 = vector.broadcast %cst_31 : f32 to vector<8x8xf32>
    %58 = arith.maximumf %56, %57 : vector<8x8xf32>
    %59 = vector.shape_cast %58 : vector<8x8xf32> to vector<1x8x8xf32>
    %cst_32 = arith.constant dense<0.000000e+00> : vector<8x8xf32>
    %60 = vector.multi_reduction <add>, %59, %cst_32 [0] : vector<1x8x8xf32> to vector<8x8xf32>
    %61 = arith.addf %51, %60 : vector<8x8xf32>
    %c3_i32 = arith.constant 3 : i32
    %62 = arith.index_cast %c3_i32 : i32 to index
    %c0_33 = arith.constant 0 : index
    %63 = vector.load %arg7[%62, %c0_33] : memref<8x8xf32, #tpu.memory_space<vmem>>, vector<1x8xf32>
    %c0_34 = arith.constant 0 : index
    %c0_35 = arith.constant 0 : index
    %64 = vector.load %arg6[%c0_34, %c0_35] : memref<8x8xf32, #tpu.memory_space<vmem>>, vector<8x8xf32>
    %65 = vector.broadcast %63 : vector<1x8xf32> to vector<8x8xf32>
    %66 = arith.subf %64, %65 : vector<8x8xf32>
    %cst_36 = arith.constant 0.000000e+00 : f32
    %67 = vector.broadcast %cst_36 : f32 to vector<8x8xf32>
    %68 = arith.maximumf %66, %67 : vector<8x8xf32>
    %69 = vector.shape_cast %68 : vector<8x8xf32> to vector<1x8x8xf32>
    %cst_37 = arith.constant dense<0.000000e+00> : vector<8x8xf32>
    %70 = vector.multi_reduction <add>, %69, %cst_37 [0] : vector<1x8x8xf32> to vector<8x8xf32>
    %71 = arith.addf %61, %70 : vector<8x8xf32>
    %c4_i32 = arith.constant 4 : i32
    %72 = arith.index_cast %c4_i32 : i32 to index
    %c0_38 = arith.constant 0 : index
    %73 = vector.load %arg7[%72, %c0_38] : memref<8x8xf32, #tpu.memory_space<vmem>>, vector<1x8xf32>
    %c0_39 = arith.constant 0 : index
    %c0_40 = arith.constant 0 : index
    %74 = vector.load %arg6[%c0_39, %c0_40] : memref<8x8xf32, #tpu.memory_space<vmem>>, vector<8x8xf32>
    %75 = vector.broadcast %73 : vector<1x8xf32> to vector<8x8xf32>
    %76 = arith.subf %74, %75 : vector<8x8xf32>
    %cst_41 = arith.constant 0.000000e+00 : f32
    %77 = vector.broadcast %cst_41 : f32 to vector<8x8xf32>
    %78 = arith.maximumf %76, %77 : vector<8x8xf32>
    %79 = vector.shape_cast %78 : vector<8x8xf32> to vector<1x8x8xf32>
    %cst_42 = arith.constant dense<0.000000e+00> : vector<8x8xf32>
    %80 = vector.multi_reduction <add>, %79, %cst_42 [0] : vector<1x8x8xf32> to vector<8x8xf32>
    %81 = arith.addf %71, %80 : vector<8x8xf32>
    %c5_i32 = arith.constant 5 : i32
    %82 = arith.index_cast %c5_i32 : i32 to index
    %c0_43 = arith.constant 0 : index
    %83 = vector.load %arg7[%82, %c0_43] : memref<8x8xf32, #tpu.memory_space<vmem>>, vector<1x8xf32>
    %c0_44 = arith.constant 0 : index
    %c0_45 = arith.constant 0 : index
    %84 = vector.load %arg6[%c0_44, %c0_45] : memref<8x8xf32, #tpu.memory_space<vmem>>, vector<8x8xf32>
    %85 = vector.broadcast %83 : vector<1x8xf32> to vector<8x8xf32>
    %86 = arith.subf %84, %85 : vector<8x8xf32>
    %cst_46 = arith.constant 0.000000e+00 : f32
    %87 = vector.broadcast %cst_46 : f32 to vector<8x8xf32>
    %88 = arith.maximumf %86, %87 : vector<8x8xf32>
    %89 = vector.shape_cast %88 : vector<8x8xf32> to vector<1x8x8xf32>
    %cst_47 = arith.constant dense<0.000000e+00> : vector<8x8xf32>
    %90 = vector.multi_reduction <add>, %89, %cst_47 [0] : vector<1x8x8xf32> to vector<8x8xf32>
    %91 = arith.addf %81, %90 : vector<8x8xf32>
    %c6_i32 = arith.constant 6 : i32
    %92 = arith.index_cast %c6_i32 : i32 to index
    %c0_48 = arith.constant 0 : index
    %93 = vector.load %arg7[%92, %c0_48] : memref<8x8xf32, #tpu.memory_space<vmem>>, vector<1x8xf32>
    %c0_49 = arith.constant 0 : index
    %c0_50 = arith.constant 0 : index
    %94 = vector.load %arg6[%c0_49, %c0_50] : memref<8x8xf32, #tpu.memory_space<vmem>>, vector<8x8xf32>
    %95 = vector.broadcast %93 : vector<1x8xf32> to vector<8x8xf32>
    %96 = arith.subf %94, %95 : vector<8x8xf32>
    %cst_51 = arith.constant 0.000000e+00 : f32
    %97 = vector.broadcast %cst_51 : f32 to vector<8x8xf32>
    %98 = arith.maximumf %96, %97 : vector<8x8xf32>
    %99 = vector.shape_cast %98 : vector<8x8xf32> to vector<1x8x8xf32>
    %cst_52 = arith.constant dense<0.000000e+00> : vector<8x8xf32>
    %100 = vector.multi_reduction <add>, %99, %cst_52 [0] : vector<1x8x8xf32> to vector<8x8xf32>
    %101 = arith.addf %91, %100 : vector<8x8xf32>
    %c7_i32 = arith.constant 7 : i32
    %102 = arith.index_cast %c7_i32 : i32 to index
    %c0_53 = arith.constant 0 : index
    %103 = vector.load %arg7[%102, %c0_53] : memref<8x8xf32, #tpu.memory_space<vmem>>, vector<1x8xf32>
    %c0_54 = arith.constant 0 : index
    %c0_55 = arith.constant 0 : index
    %104 = vector.load %arg6[%c0_54, %c0_55] : memref<8x8xf32, #tpu.memory_space<vmem>>, vector<8x8xf32>
    %105 = vector.broadcast %103 : vector<1x8xf32> to vector<8x8xf32>
    %106 = arith.subf %104, %105 : vector<8x8xf32>
    %cst_56 = arith.constant 0.000000e+00 : f32
    %107 = vector.broadcast %cst_56 : f32 to vector<8x8xf32>
    %108 = arith.maximumf %106, %107 : vector<8x8xf32>
    %109 = vector.shape_cast %108 : vector<8x8xf32> to vector<1x8x8xf32>
    %cst_57 = arith.constant dense<0.000000e+00> : vector<8x8xf32>
    %110 = vector.multi_reduction <add>, %109, %cst_57 [0] : vector<1x8x8xf32> to vector<8x8xf32>
    %111 = arith.addf %101, %110 : vector<8x8xf32>
    %c8_i32_58 = arith.constant 8 : i32
    %112 = vector.shape_cast %111 : vector<8x8xf32> to vector<1x8x8xf32>
    %cst_59 = arith.constant dense<0.000000e+00> : vector<1xf32>
    %113 = vector.multi_reduction <add>, %112, %cst_59 [1, 2] : vector<1x8x8xf32> to vector<1xf32>
    %114 = vector.shape_cast %113 : vector<1xf32> to vector<1x1x1xf32>
    %115 = vector.extract %114[0, 0, 0] : f32 from vector<1x1x1xf32>
    %116 = vector.broadcast %115 : f32 to vector<1x8x128xf32>
    %c0_60 = arith.constant 0 : index
    %c0_61 = arith.constant 0 : index
    %c0_62 = arith.constant 0 : index
    %117 = vector.load %arg5[%c0_60, %c0_61, %c0_62] : memref<1x8x128xf32, #tpu.memory_space<vmem>>, vector<1x8x128xf32>
    tpu.vector_store %arg5[%c0_60, %c0_61, %c0_62], %116 {strides = array<i32>} : memref<1x8x128xf32, #tpu.memory_space<vmem>>, vector<1x8x128xf32>,
    return
  }
  func.func @transform_0(%arg0: i32) -> (i32, i32) {
    %c0_i32 = arith.constant 0 : i32
    %c0_i32_0 = arith.constant 0 : i32
    %c0_i32_1 = arith.constant 0 : i32
    return %c0_i32, %c0_i32_0 : i32, i32
  }
  func.func @transform_1(%arg0: i32) -> (i32, i32) {
    %c0_i32 = arith.constant 0 : i32
    %c0_i32_0 = arith.constant 0 : i32
    return %c0_i32, %arg0 : i32, i32
  }
  func.func @transform_2(%arg0: i32) -> (i32, i32) {
    %c0_i32 = arith.constant 0 : i32
    %c0_i32_0 = arith.constant 0 : i32
    %c0_i32_1 = arith.constant 0 : i32
    return %c0_i32, %c0_i32_0 : i32, i32
  }
  func.func @transform_3(%arg0: i32) -> (i32, i32) {
    %c0_i32 = arith.constant 0 : i32
    %c0_i32_0 = arith.constant 0 : i32
    return %arg0, %c0_i32 : i32, i32
  }
  func.func @transform_4(%arg0: i32) -> (i32, i32, i32) {
    %c0_i32 = arith.constant 0 : i32
    %c0_i32_0 = arith.constant 0 : i32
    %c0_i32_1 = arith.constant 0 : i32
    return %arg0, %c0_i32, %c0_i32_0 : i32, i32, i32
  }
}

</mosaic_0001>

<llo_original>
// kernel: tpu_custom_call.1
$region0: #{tpu_custom_call.1}
  #allocation0 [shape = 'u32[]', space=smem, size = 0x4, offset = 0x4, fixed_abs, tag = 'smem constant byte address 0x4 - core index']
  #allocation1 [shape = 'u32[144,128]{1,0:T(1,128)}', space=vmem, size = 0x12000, scoped, tag = 'internal scratch']
  #allocation2 [shape = 'f32[8,8]{1,0:T(8,128)}', space=vmem, size = 0x1000, scoped, tag = 'scratch operand']
  #allocation3 [shape = 'f32[8,8]{1,0:T(8,128)}', space=vmem, size = 0x1000, scoped, tag = 'scratch operand']
  %s0 = inlined_call_operand.vmem [shape: s32[8,1], index: 0, kind: input, shape index: {}]
  %s1 = inlined_call_operand.hbm [shape: s32[1,8], index: 1, kind: input, shape index: {}]
  %s2 = inlined_call_operand.vmem [shape: f32[8,32], index: 2, kind: input, shape index: {}]
  %s3 = inlined_call_operand.vmem [shape: f32[8,32], index: 3, kind: input, shape index: {}]
  %s4 = inlined_call_operand.hbm [shape: f32[1,8,128], index: 4, kind: output, shape index: {}]
  %s5 = sld [smem:[#allocation0]]
  $region30: #{tpu_custom_call.1} parent=0
    _
  %s7 = ssub.s32 1, %s5
  %s8 = scalar_select 0, %s7, %s5
  $region1: #{tpu_custom_call.1} parent=0
    #allocation4 [shape = 'u8[512]{0}', space=vmem, size = 0x400, scoped, tag = 'input window, operand 1, single buffered']
    #allocation5 [shape = 's32[1]{0}', space=sflag, size = 0x4, scoped, tag = 'scoped memory for tpu_custom_call.1']
    #allocation6 [shape = 's32[1]{0}', space=sflag, size = 0x4, scoped, tag = 'scoped memory for tpu_custom_call.1']
    #allocation7 [shape = 'u8[4096]{0}', space=vmem, size = 0x1000, scoped, tag = 'output window, operand 0, single buffered']
    %9 = vsyncpa [#allocation5], 0
    %10 = vsyncpa [#allocation6], 0
    // Predicated region
    $region2: #{tpu_custom_call.1} parent=1 // pred_check
      _
    $region3: #{tpu_custom_call.1} parent=1 // pred_check_branch
      %12 = sbr.rel (0) target = $region5
    $region4: #{tpu_custom_call.1} parent=1 // pred_region
      _
    $region5: #{tpu_custom_call.1} parent=1 // pred_fallthru
      _
    // Predicated region
    $region6: #{tpu_custom_call.1} parent=1 // pred_check
      _
    $region7: #{tpu_custom_call.1} parent=1 // pred_check_branch
      %14 = sbr.rel (0) target = $region9
    $region8: #{tpu_custom_call.1} parent=1 // pred_region
      %s16 = ssub.s32 16, 16
      %17 = vsyncadd [#allocation5], %s16
      %s19 = sshll.u32 [#allocation4], 4
      %s20 = int_to_ptr.vmem [resolvable:$true] %s19
      %22 = dma.hbm_to_vmem [thread:$0]  %s1, 16, %s20, [#allocation5]
    $region9: #{tpu_custom_call.1} parent=1 // pred_fallthru
      _
    // Predicated region
    $region10: #{tpu_custom_call.1} parent=1 // pred_check
      _
    $region11: #{tpu_custom_call.1} parent=1 // pred_check_branch
      %24 = sbr.rel (0) target = $region13
    $region12: #{tpu_custom_call.1} parent=1 // pred_region
      _
    $region13: #{tpu_custom_call.1} parent=1 // pred_fallthru
      _
    // Predicated region
    $region14: #{tpu_custom_call.1} parent=1 // pred_check
      _
    $region15: #{tpu_custom_call.1} parent=1 // pred_check_branch
      %26 = sbr.rel (0) target = $region17
    $region16: #{tpu_custom_call.1} parent=1 // pred_region
      _
    $region17: #{tpu_custom_call.1} parent=1 // pred_fallthru
      _
    // Predicated region
    $region18: #{tpu_custom_call.1} parent=1 // pred_check
      _
    $region19: #{tpu_custom_call.1} parent=1 // pred_check_branch
      %28 = sbr.rel (0) target = $region21
    $region20: #{tpu_custom_call.1} parent=1 // pred_region
      %29 = dma.done [#allocation5], 16
    $region21: #{tpu_custom_call.1} parent=1 // pred_fallthru
      _
    %s30 = smul.u32 0, 8
    %v31 = vld [vmem:[%s2] sm:$0xff]
    %v32 = vld [vmem:[%s3] sm:$0xff]
    %vm33 = vcmask 261120
    %v35 = vsel %vm33, %v31, 0
    %v38 = vsel %vm33, %v32, 0
    %40 = vmatprep.subr.mxu0 0.0
    %41 = vmatpush1.xpose.msra.mxu0 %v38
    %42 = vmatprep.subr.mxu0 0.0
    %43 = vmatpush1.xpose.msra.mxu0 0.0
    %44 = vmatprep.subr.mxu0 0.0
    %45 = vmatpush1.xpose.msra.mxu0 0.0
    %46 = vmatprep.subr.mxu0 0.0
    %47 = vmatpush1.xpose.msra.mxu0 0.0
    %48 = vmatprep.subr.mxu0 0.0
    %49 = vmatpush1.xpose.msra.mxu0 0.0
    %50 = vmatprep.subr.mxu0 0.0
    %51 = vmatpush1.xpose.msra.mxu0 0.0
    %52 = vmatprep.subr.mxu0 0.0
    %53 = vmatpush1.xpose.msra.mxu0 0.0
    %54 = vmatprep.subr.mxu0 0.0
    %55 = vmatpush1.xpose.msra.mxu0 0.0
    %56 = vmatprep.subr.mxu0 0.0
    %57 = vmatpush1.xpose.msra.mxu0 0.0
    %58 = vmatprep.subr.mxu0 0.0
    %59 = vmatpush1.xpose.msra.mxu0 0.0
    %60 = vmatprep.subr.mxu0 0.0
    %61 = vmatpush1.xpose.msra.mxu0 0.0
    %62 = vmatprep.subr.mxu0 0.0
    %63 = vmatpush1.xpose.msra.mxu0 0.0
    %64 = vmatprep.subr.mxu0 0.0
    %65 = vmatpush1.xpose.msra.mxu0 0.0
    %66 = vmatprep.subr.mxu0 0.0
    %67 = vmatpush1.xpose.msra.mxu0 0.0
    %68 = vmatprep.subr.mxu0 0.0
    %69 = vmatpush1.xpose.msra.mxu0 0.0
    %70 = vmatprep.subr.mxu0 0.0
    %71 = vmatpush1.xpose.msra.mxu0 0.0
    %72 = vmatprep.subr.mxu0 0.0
    %73 = vmatpush1.xpose.msra.mxu0 0.0
    %74 = vmatprep.subr.mxu0 0.0
    %75 = vmatpush1.xpose.msra.mxu0 0.0
    %76 = vmatprep.subr.mxu0 0.0
    %77 = vmatpush1.xpose.msra.mxu0 0.0
    %78 = vmatprep.subr.mxu0 0.0
    %79 = vmatpush1.xpose.msra.mxu0 0.0
    %80 = vmatprep.subr.mxu0 0.0
    %81 = vmatpush1.xpose.msra.mxu0 0.0
    %82 = vmatprep.subr.mxu0 0.0
    %83 = vmatpush1.xpose.msra.mxu0 0.0
    %84 = vmatprep.subr.mxu0 0.0
    %85 = vmatpush1.xpose.msra.mxu0 0.0
    %86 = vmatprep.subr.mxu0 0.0
    %87 = vmatpush1.xpose.msra.mxu0 0.0
    %88 = vmatprep.subr.mxu0 0.0
    %89 = vmatpush1.xpose.msra.mxu0 0.0
    %90 = vmatprep.subr.mxu0 0.0
    %91 = vmatpush1.xpose.msra.mxu0 0.0
    %92 = vmatprep.subr.mxu0 0.0
    %93 = vmatpush1.xpose.msra.mxu0 0.0
    %94 = vmatprep.subr.mxu0 0.0
    %95 = vmatpush1.xpose.msra.mxu0 0.0
    %96 = vmatprep.subr.mxu0 0.0
    %97 = vmatpush1.xpose.msra.mxu0 0.0
    %98 = vmatprep.subr.mxu0 0.0
    %99 = vmatpush1.xpose.msra.mxu0 0.0
    %100 = vmatprep.subr.mxu0 0.0
    %101 = vmatpush1.xpose.msra.mxu0 0.0
    %102 = vmatprep.subr.mxu0 0.0
    %103 = vmatpush1.xpose.msra.mxu0 0.0
    %104 = vmatprep.mubr.f32.mxu0 0.0
    %105 = vmatmul.mubr.f32.gmra.mrb[0].mxu0 %v35
    %v106 = vpop.f32.mrb[0].mxu0
    %v107 = vadd.f32 0.0, %v106
    %v108 = vpop.f32.mrb[0].mxu0
    %109 = vdwg.mxu0
    %v110 = vlaneseq
    %v111 = vshrl.u32 %v110, 7
    %v112 = vlaneseq
    %v113 = vand.u32 %v112, 127
    %v114 = vstv %s30
    %v115 = vadd.s32 %v114, %v113
    %v116 = vld [vmem:[%s0] sm:$0xff]
    %v117 = vld [vmem:[#allocation4] sm:$0x1]
    %118 = vset.pattern.permute.xlu0 0
    %119 = vperm.xlu0 %118, %v116
    %v120 = vpop.permute.xlu0 %119
    %v121 = vlaneseq
    %v122 = vshrl.u32 %v121, 7
    %v123 = vsub.s32 0, %v122
    %v124 = vrot.slane %v117, %v123
    %vm125 = vcmp.eq.s32.totalorder %v120, %v124
    %vm126 = vcmp.lt.s32.totalorder %v111, 8
    %vm127 = vcmp.lt.s32.totalorder %v115, 8
    %vm128 = vmxor %vm125, 1
    %vm129 = vmand %vm128, %vm126
    %vm130 = vmand %vm129, %vm127
    %vm131 = vcmp.ne.s32.totalorder %v111, %v115
    %vm132 = vmand %vm125, %vm131
    %vm133 = vmand %vm132, %vm126
    %v134 = vsel %vm130, %v107, -1e+30
    %v135 = vadd.f32 %v134, 0.2
    %vm136 = vcmask 64512
    %137 = vst.msk [vmem:[#allocation2] sm:$0xff] %vm136, %v135
    %v138 = vsel %vm133, %v107, 1e+30
    %139 = vst.msk [vmem:[#allocation3] sm:$0xff] %vm136, %v138
    %v140 = vld [vmem:[#allocation3] sm:$0x1]
    %v141 = vld [vmem:[#allocation2] sm:$0xff]
    %v142 = vlaneseq
    %v143 = vshrl.u32 %v142, 7
    %v144 = vsub.s32 0, %v143
    %v145 = vrot.slane %v140, %v144
    %v146 = vsub.f32 %v141, %v145
    %v147 = vmax.f32 %v146, 0.0
    %v148 = vadd.f32 %v147, 0.0
    %v149 = vadd.f32 %v148, 0.0
    %v150 = vld [vmem:[#allocation3 + $0x1] sm:$0x1]
    %v151 = vlaneseq
    %v152 = vshrl.u32 %v151, 7
    %v153 = vsub.s32 0, %v152
    %v154 = vrot.slane %v150, %v153
    %v155 = vsub.f32 %v141, %v154
    %v156 = vmax.f32 %v155, 0.0
    %v157 = vadd.f32 %v156, 0.0
    %v158 = vadd.f32 %v149, %v157
    %v159 = vld [vmem:[#allocation3 + $0x2] sm:$0x1]
    %v160 = vlaneseq
    %v161 = vshrl.u32 %v160, 7
    %v162 = vsub.s32 0, %v161
    %v163 = vrot.slane %v159, %v162
    %v164 = vsub.f32 %v141, %v163
    %v165 = vmax.f32 %v164, 0.0
    %v166 = vadd.f32 %v165, 0.0
    %v167 = vadd.f32 %v158, %v166
    %v168 = vld [vmem:[#allocation3 + $0x3] sm:$0x1]
    %v169 = vlaneseq
    %v170 = vshrl.u32 %v169, 7
    %v171 = vsub.s32 0, %v170
    %v172 = vrot.slane %v168, %v171
    %v173 = vsub.f32 %v141, %v172
    %v174 = vmax.f32 %v173, 0.0
    %v175 = vadd.f32 %v174, 0.0
    %v176 = vadd.f32 %v167, %v175
    %v177 = vld [vmem:[#allocation3 + $0x4] sm:$0x1]
    %v178 = vlaneseq
    %v179 = vshrl.u32 %v178, 7
    %v180 = vsub.s32 0, %v179
    %v181 = vrot.slane %v177, %v180
    %v182 = vsub.f32 %v141, %v181
    %v183 = vmax.f32 %v182, 0.0
    %v184 = vadd.f32 %v183, 0.0
    %v185 = vadd.f32 %v176, %v184
    %v186 = vld [vmem:[#allocation3 + $0x5] sm:$0x1]
    %v187 = vlaneseq
    %v188 = vshrl.u32 %v187, 7
    %v189 = vsub.s32 0, %v188
    %v190 = vrot.slane %v186, %v189
    %v191 = vsub.f32 %v141, %v190
    %v192 = vmax.f32 %v191, 0.0
    %v193 = vadd.f32 %v192, 0.0
    %v194 = vadd.f32 %v185, %v193
    %v195 = vld [vmem:[#allocation3 + $0x6] sm:$0x1]
    %v196 = vlaneseq
    %v197 = vshrl.u32 %v196, 7
    %v198 = vsub.s32 0, %v197
    %v199 = vrot.slane %v195, %v198
    %v200 = vsub.f32 %v141, %v199
    %v201 = vmax.f32 %v200, 0.0
    %v202 = vadd.f32 %v201, 0.0
    %v203 = vadd.f32 %v194, %v202
    %v204 = vld [vmem:[#allocation3 + $0x7] sm:$0x1]
    %v205 = vlaneseq
    %v206 = vshrl.u32 %v205, 7
    %v207 = vsub.s32 0, %v206
    %v208 = vrot.slane %v204, %v207
    %v209 = vsub.f32 %v141, %v208
    %v210 = vmax.f32 %v209, 0.0
    %v211 = vadd.f32 %v210, 0.0
    %v212 = vadd.f32 %v203, %v211
    %v213 = vsel %vm136, %v212, 0.0
    %214 = vadd.xlane.f32.xlu0 %v213
    %v215 = vpop.xlane.xlu0 %214
    %v216 = vrot.slane %v215, 4
    %v217 = vadd.f32 %v215, %v216
    %v218 = vrot.slane %v217, 2
    %v219 = vadd.f32 %v217, %v218
    %v220 = vrot.slane %v219, 1
    %v221 = vadd.f32 %v219, %v220
    %s222 = vtos %v221
    %v223 = vstv %s222
    %224 = vst [vmem:[#allocation7] sm:$0xff] %v223
    // Predicated region
    $region22: #{tpu_custom_call.1} parent=1 // pred_check
      _
    $region23: #{tpu_custom_call.1} parent=1 // pred_check_branch
      %226 = sbr.rel (0) target = $region25
    $region24: #{tpu_custom_call.1} parent=1 // pred_region
      %s228 = ssub.s32 128, 128
      %229 = vsyncadd [#allocation6], %s228
      %s231 = sshll.u32 [#allocation7], 4
      %s232 = int_to_ptr.vmem [resolvable:$true] %s231
      %234 = dma.vmem_to_hbm [thread:$0]  %s232, 128, %s4, [#allocation6]
    $region25: #{tpu_custom_call.1} parent=1 // pred_fallthru
      _
    // Predicated region
    $region26: #{tpu_custom_call.1} parent=1 // pred_check
      _
    $region27: #{tpu_custom_call.1} parent=1 // pred_check_branch
      %236 = sbr.rel (0) target = $region29
    $region28: #{tpu_custom_call.1} parent=1 // pred_region
      %237 = dma.done [#allocation6], 128
    $region29: #{tpu_custom_call.1} parent=1 // pred_fallthru
      _
    %238 = vsyncpa [#allocation5], 1
    %239 = vsyncpa [#allocation6], 1

</llo_original>
